<compile_context>
chip_gen: v7x
topology: tpu7x:2x2x1
jax: 0.10.0
libtpu: 0.0.40
codegen_flags: <defaults>
</compile_context>

<pallas_src>
import functools

import jax
import jax.numpy as jnp
from jax.experimental import pallas as pl
from jax.experimental.pallas import tpu as pltpu


# ---------------------------------------------------------------------------
# Tiny squeeze-excite epilogue shared by both kernels (runs once per batch).
# ---------------------------------------------------------------------------
def _channel_attention(sfe, sfi, aev_t, aim_t, w2, inv_hw):
    """w_ca (C,1) from per-channel spatial sums.

    sfe/sfi : (C, 1) f32 sums of F_event / f_img over HW
    aev_t   : (C, CR) = (ca_w1 @ W_event).T
    aim_t   : (C, CR) = (ca_w1 @ W_img).T
    w2      : (C, CR) = ca_w2
    Uses only broadcast multiplies + sublane/lane reductions (no tiny matmuls).
    """
    mfe = sfe * inv_hw
    mfi = sfi * inv_hw
    h1 = (jnp.sum(aev_t * mfe, axis=0, keepdims=True) +
          jnp.sum(aim_t * mfi, axis=0, keepdims=True))          # (1, CR)
    h1 = jnp.maximum(h1, 0.0)                                    # ReLU
    z = jnp.sum(w2 * h1, axis=1, keepdims=True)                  # (C, 1)
    return 1.0 / (1.0 + jnp.exp(-z))                             # sigmoid


# ---------------------------------------------------------------------------
# Fused single-pass kernel (read once, write once).
# ---------------------------------------------------------------------------
def _eec_fused_kernel(fe_ref, mask_ref, fi_ref, aev_ref, aim_ref, w2_ref,
                      out_ref, fi_scr, sfe_ref, sfi_ref):
    # fe_ref / fi_ref : (1, C, T)  streamed event / image tiles
    # mask_ref        : (1, 1, T)
    # aev/aim/w2      : (C, CR)    folded SE weights (constant blocks)
    # out_ref         : (1, C, HW) resident per-batch output (doubles as Fe stash)
    # fi_scr          : (C, HW)    VMEM stash of the image tiles
    # sfe/sfi         : (C, 1)     f32 running spatial sums
    j = pl.program_id(1)
    t = fe_ref.shape[-1]
    hw = out_ref.shape[-1]

    @pl.when(j == 0)
    def _():
        sfe_ref[...] = jnp.zeros_like(sfe_ref)
        sfi_ref[...] = jnp.zeros_like(sfi_ref)

    fe = fe_ref[0].astype(jnp.float32)           # (C, T)
    fi = fi_ref[0].astype(jnp.float32)           # (C, T)
    m = mask_ref[0].astype(jnp.float32)          # (1, T)
    Fe = fe * (1.0 + m)                          # F_event = f_event*(1 + Mask)

    sfe_ref[...] += jnp.sum(Fe, axis=-1, keepdims=True)
    sfi_ref[...] += jnp.sum(fi, axis=-1, keepdims=True)

    # Stash this tile: Fe into the resident output block, f_img into scratch.
    if t == hw:                                  # single full-row tile
        out_ref[0] = Fe.astype(out_ref.dtype)
        fi_scr[...] = fi_ref[0]
    else:                                        # t is a multiple-of-128 divisor of hw
        off = pl.multiple_of(j * t, 128)
        out_ref[0, :, pl.ds(off, t)] = Fe.astype(out_ref.dtype)
        fi_scr[:, pl.ds(off, t)] = fi_ref[0]

    @pl.when(j == pl.num_programs(1) - 1)
    def _():
        wca = _channel_attention(sfe_ref[...], sfi_ref[...],
                                 aev_ref[...], aim_ref[...], w2_ref[...],
                                 1.0 / float(hw))                # (C, 1)
        fe_full = out_ref[0].astype(jnp.float32)                 # (C, HW)
        fi_full = fi_scr[...].astype(jnp.float32)                # (C, HW)
        out_ref[0] = (fe_full * wca + fi_full).astype(out_ref.dtype)


# ---------------------------------------------------------------------------
# Two-pass fallback kernels (huge feature maps that do not fit VMEM-resident).
# ---------------------------------------------------------------------------
def _eec_reduce_kernel(hw, needs_tail_mask,
                       fe_ref, mask_ref, fi_ref, aev_ref, aim_ref, w2_ref,
                       wca_ref, sfe_ref, sfi_ref):
    j = pl.program_id(1)

    @pl.when(j == 0)
    def _():
        sfe_ref[...] = jnp.zeros_like(sfe_ref)
        sfi_ref[...] = jnp.zeros_like(sfi_ref)

    fe = fe_ref[0].astype(jnp.float32)
    fi = fi_ref[0].astype(jnp.float32)
    m = mask_ref[0].astype(jnp.float32)
    Fe = fe * (1.0 + m)

    if needs_tail_mask:
        t = fe.shape[-1]
        lane = jax.lax.broadcasted_iota(jnp.int32, fe.shape, 1)
        valid = lane < (hw - j * t)
        Fe = jnp.where(valid, Fe, 0.0)
        fi = jnp.where(valid, fi, 0.0)

    sfe_ref[...] += jnp.sum(Fe, axis=-1, keepdims=True)
    sfi_ref[...] += jnp.sum(fi, axis=-1, keepdims=True)

    @pl.when(j == pl.num_programs(1) - 1)
    def _():
        wca_ref[0] = _channel_attention(sfe_ref[...], sfi_ref[...],
                                        aev_ref[...], aim_ref[...], w2_ref[...],
                                        1.0 / float(hw))


def _eec_apply_kernel(fe_ref, mask_ref, fi_ref, wca_ref, out_ref):
    fe = fe_ref[0].astype(jnp.float32)           # (C, T)
    fi = fi_ref[0].astype(jnp.float32)           # (C, T)
    m = mask_ref[0].astype(jnp.float32)          # (1, T)
    wca = wca_ref[0]                             # (C, 1) f32
    Fe = fe * (1.0 + m)
    out_ref[0] = (Fe * wca + fi).astype(out_ref.dtype)


# ---------------------------------------------------------------------------
# VMEM budgets / tiling.
# ---------------------------------------------------------------------------
def _vmem_capacity_bytes():
    try:
        return int(pltpu.get_tpu_info().vmem_capacity_bytes)
    except Exception:
        return 64 << 20          # conservative default: v7x per-TensorCore VMEM


def _pick_tile(hw, per_lane_bytes, budget_bytes, require_divisor):
    """Pick an HW tile length.

    Returns (tile, num_tiles, needs_tail_mask).  The tile is either a
    multiple-of-128 length (lane-dense, aligned) or the full row.  Keeps >= 4
    tiles per batch for large rows so the auto-pipeline can overlap DMA with
    compute, and bounds the double-buffered footprint by `budget_bytes`.
    """
    cap = max(128, budget_bytes // max(per_lane_bytes, 1))
    if hw >= 512:
        cap = min(cap, max(128, hw // 4))       # guarantee >= 4 tiles
    cap = min(cap, hw)
    if hw % 128 == 0:
        cap = max(128, (cap // 128) * 128)
        tile = 128
        for cand in range(cap, 127, -128):
            if hw % cand == 0:
                tile = cand
                break
        return tile, hw // tile, False
    if require_divisor or hw <= cap:
        return hw, 1, False                     # full-row block (block dim == array dim)
    tile = max(128, (cap // 128) * 128)
    return tile, pl.cdiv(hw, tile), True


# ---------------------------------------------------------------------------
# Forward wrapper.
# ---------------------------------------------------------------------------
@functools.partial(jax.jit, static_argnames=("force_two_pass",))
def eec_forward(f_img, f_event, mask, conv_w, ca_w1, ca_w2, *, force_two_pass=False):
    """f_img, f_event: (B, C, H, W); mask: (B, 1, H, W); conv_w: (C, 2C);
    ca_w1: (C//r, C); ca_w2: (C, C//r).  NCHW layout, like the PyTorch module."""
    assert f_img.shape == f_event.shape, "the shape of image doesnt equal to event"
    b, c, h, w = f_img.shape
    hw = h * w
    cr = ca_w1.shape[0]

    # NCHW -> (B, C, HW): pure reshape (HW lane-dense, channels on sublanes).
    fi = f_img.reshape(b, c, hw)
    fe = f_event.reshape(b, c, hw)
    mk = mask.reshape(b, 1, hw)

    # Fold the 1x1 conv into the first SE layer (exact: no bias / nonlinearity
    # before the global average pool):
    #   relu(W1 @ (W_ev@mean_fe + W_im@mean_fi)) == relu(Aev@mean_fe + Aim@mean_fi)
    w_ev = conv_w[:, :c].astype(jnp.float32)
    w_im = conv_w[:, c:].astype(jnp.float32)
    w1 = ca_w1.astype(jnp.float32)
    aev_t = (w1 @ w_ev).T                        # (C, CR)
    aim_t = (w1 @ w_im).T                        # (C, CR)
    w2 = ca_w2.astype(jnp.float32)               # (C, CR)

    itemsize = jnp.dtype(f_img.dtype).itemsize
    vmem_cap = _vmem_capacity_bytes()
    vmem_limit = int(min(vmem_cap * 3 // 4, 96 << 20))   # ~48 MiB v7x, 96 MiB v5e/v6e
    stream_budget = min(16 << 20, vmem_limit // 3)
    resident_budget = vmem_limit - (8 << 20)

    cparams_seq = pltpu.CompilerParams(
        dimension_semantics=("parallel", "arbitrary"),
        vmem_limit_bytes=vmem_limit)

    # ---- preferred path: single fused call (read once, write once) ---------
    t_f, nt_f, _ = _pick_tile(hw, 2 * (2 * c + 1) * itemsize, stream_budget,
                              require_divisor=True)
    fused_bytes = (2 * (2 * c + 1) * t_f * itemsize   # double-buffered input tiles
                   + 2 * c * hw * itemsize            # resident output block
                   + c * hw * itemsize                # f_img VMEM stash
                   + c * hw * 4                       # epilogue f32 temp headroom
                   + (1 << 20))                       # weights / sums / slack
    if (not force_two_pass) and fused_bytes <= resident_budget:
        out = pl.pallas_call(
            _eec_fused_kernel,
            out_shape=jax.ShapeDtypeStruct((b, c, hw), f_img.dtype),
            grid=(b, nt_f),
            in_specs=[
                pl.BlockSpec((1, c, t_f), lambda i, j: (i, 0, j)),   # f_event
                pl.BlockSpec((1, 1, t_f), lambda i, j: (i, 0, j)),   # mask
                pl.BlockSpec((1, c, t_f), lambda i, j: (i, 0, j)),   # f_img
                pl.BlockSpec((c, cr), lambda i, j: (0, 0)),          # Aev^T
                pl.BlockSpec((c, cr), lambda i, j: (0, 0)),          # Aim^T
                pl.BlockSpec((c, cr), lambda i, j: (0, 0)),          # W2
            ],
            out_specs=pl.BlockSpec((1, c, hw), lambda i, j: (i, 0, 0)),
            scratch_shapes=[
                pltpu.VMEM((c, hw), f_img.dtype),     # f_img stash
                pltpu.VMEM((c, 1), jnp.float32),      # sum(F_event)
                pltpu.VMEM((c, 1), jnp.float32),      # sum(f_img)
            ],
            compiler_params=cparams_seq,
        )(fe, mk, fi, aev_t, aim_t, w2)
        return out.reshape(b, c, h, w)

    # ---- fallback: two streamed passes (feature map too big for VMEM) ------
    t1, nt1, tail1 = _pick_tile(hw, 2 * (2 * c + 1) * itemsize, stream_budget,
                                require_divisor=False)
    w_ca = pl.pallas_call(
        functools.partial(_eec_reduce_kernel, hw, tail1),
        out_shape=jax.ShapeDtypeStruct((b, c, 1), jnp.float32),
        grid=(b, nt1),
        in_specs=[
            pl.BlockSpec((1, c, t1), lambda i, j: (i, 0, j)),
            pl.BlockSpec((1, 1, t1), lambda i, j: (i, 0, j)),
            pl.BlockSpec((1, c, t1), lambda i, j: (i, 0, j)),
            pl.BlockSpec((c, cr), lambda i, j: (0, 0)),
            pl.BlockSpec((c, cr), lambda i, j: (0, 0)),
            pl.BlockSpec((c, cr), lambda i, j: (0, 0)),
        ],
        out_specs=pl.BlockSpec((1, c, 1), lambda i, j: (i, 0, 0)),
        scratch_shapes=[
            pltpu.VMEM((c, 1), jnp.float32),
            pltpu.VMEM((c, 1), jnp.float32),
        ],
        compiler_params=cparams_seq,
    )(fe, mk, fi, aev_t, aim_t, w2)

    t2, nt2, _ = _pick_tile(hw, 2 * (3 * c + 1) * itemsize, stream_budget,
                            require_divisor=False)
    out = pl.pallas_call(
        _eec_apply_kernel,
        out_shape=jax.ShapeDtypeStruct((b, c, hw), f_img.dtype),
        grid=(b, nt2),
        in_specs=[
            pl.BlockSpec((1, c, t2), lambda i, j: (i, 0, j)),
            pl.BlockSpec((1, 1, t2), lambda i, j: (i, 0, j)),
            pl.BlockSpec((1, c, t2), lambda i, j: (i, 0, j)),
            pl.BlockSpec((1, c, 1), lambda i, j: (i, 0, 0)),
        ],
        out_specs=pl.BlockSpec((1, c, t2), lambda i, j: (i, 0, j)),
        compiler_params=pltpu.CompilerParams(
            dimension_semantics=("parallel", "parallel"),
            vmem_limit_bytes=vmem_limit),
    )(fe, mk, fi, w_ca)
    return out.reshape(b, c, h, w)


# ---------------------------------------------------------------------------
# Plain-JAX reference of the PyTorch forward (NCHW).
# ---------------------------------------------------------------------------
def eec_reference(f_img, f_event, mask, conv_w, ca_w1, ca_w2):
    Fe = f_event * mask
    Fe = f_event + Fe                                        # (B, C, H, W)
    Fcat = jnp.concatenate([Fe, f_img], axis=1)              # (B, 2C, H, W)
    Fconv = jnp.einsum('bihw,oi->bohw', Fcat, conv_w)        # 1x1 conv, no bias
    avg = jnp.mean(Fconv, axis=(2, 3), keepdims=True)        # (B, C, 1, 1)
    h1 = jax.nn.relu(jnp.einsum('bihw,oi->bohw', avg, ca_w1))
    w_c = jax.nn.sigmoid(jnp.einsum('bihw,oi->bohw', h1, ca_w2))
    return Fe * w_c + f_img


if __name__ == "__main__":
    key = jax.random.PRNGKey(0)
    B, C, H, W = 2, 8, 16, 16
    CR = C // 4  # channel-attention reduction factor 4

    k1, k2, k3, k4, k5, k6 = jax.random.split(key, 6)
    f_img = jax.random.normal(k1, (B, C, H, W), dtype=jnp.float32)
    f_event = jax.random.normal(k2, (B, C, H, W), dtype=jnp.float32)
    mask = jax.random.uniform(k3, (B, 1, H, W), dtype=jnp.float32)

    # Deterministic synthetic parameters (shapes from the nn.Conv2d definitions).
    conv_w = jax.random.normal(k4, (C, 2 * C), dtype=jnp.float32) * 0.1  # Conv2d(2C, C, 1)
    ca_w1 = jax.random.normal(k5, (CR, C), dtype=jnp.float32) * 0.1      # Conv2d(C, C//4, 1)
    ca_w2 = jax.random.normal(k6, (C, CR), dtype=jnp.float32) * 0.1      # Conv2d(C//4, C, 1)

    ref = eec_reference(f_img, f_event, mask, conv_w, ca_w1, ca_w2)

    # Fused single-pass path (default for shapes that fit VMEM-resident).
    out = eec_forward(f_img, f_event, mask, conv_w, ca_w1, ca_w2)
    out = jax.block_until_ready(out)
    assert out.shape == (B, C, H, W)
    assert jnp.allclose(out, ref, atol=1e-5, rtol=1e-5), "fused path mismatch vs reference"

    # Also exercise the two-pass fallback path so it stays compile-clean.
    out2 = eec_forward(f_img, f_event, mask, conv_w, ca_w1, ca_w2, force_two_pass=True)
    out2 = jax.block_until_ready(out2)
    assert jnp.allclose(out2, ref, atol=1e-5, rtol=1e-5), "two-pass path mismatch vs reference"

    print("KERNEL_OK")
</pallas_src>

<mosaic_0001>
module attributes {stable_mosaic.version = 11 : i64} {
  func.func @_eec_fused_kernel(%arg0: i32, %arg1: i32, %arg2: memref<1x8x256xf32, #tpu.memory_space<vmem>>, %arg3: memref<1x1x256xf32, #tpu.memory_space<vmem>>, %arg4: memref<1x8x256xf32, #tpu.memory_space<vmem>>, %arg5: memref<8x2xf32, #tpu.memory_space<vmem>>, %arg6: memref<8x2xf32, #tpu.memory_space<vmem>>, %arg7: memref<8x2xf32, #tpu.memory_space<vmem>>, %arg8: memref<1x8x256xf32, #tpu.memory_space<vmem>>, %arg9: memref<8x256xf32, #tpu.memory_space<vmem>>, %arg10: memref<8x1xf32, #tpu.memory_space<vmem>>, %arg11: memref<8x1xf32, #tpu.memory_space<vmem>>) attributes {dimension_semantics = [#tpu.dimension_semantics<parallel>, #tpu.dimension_semantics<arbitrary>], iteration_bounds = array<i64: 2, 1>, scalar_prefetch = 0 : i64, scratch_operands = 3 : i64, tpu.core_type = #tpu.core_type<tc>, window_params = [{transform_indices = @transform_0, window_bounds = array<i64: 1, 8, 256>}, {transform_indices = @transform_1, window_bounds = array<i64: 1, 1, 256>}, {transform_indices = @transform_2, window_bounds = array<i64: 1, 8, 256>}, {pipeline_mode = #tpu.pipeline_mode<synchronous>, transform_indices = @transform_3, window_bounds = array<i64: 8, 2>}, {pipeline_mode = #tpu.pipeline_mode<synchronous>, transform_indices = @transform_4, window_bounds = array<i64: 8, 2>}, {pipeline_mode = #tpu.pipeline_mode<synchronous>, transform_indices = @transform_5, window_bounds = array<i64: 8, 2>}, {transform_indices = @transform_6, window_bounds = array<i64: 1, 8, 256>}]} {
    %c0_i32 = arith.constant 0 : i32
    %0 = arith.cmpi eq, %arg1, %c0_i32 : i32
    %1 = arith.extui %0 : i1 to i32
    %c0_i32_0 = arith.constant 0 : i32
    %2 = arith.cmpi ne, %1, %c0_i32_0 : i32
    scf.if %2 {
      %cst_29 = arith.constant 0.000000e+00 : f32
      %32 = vector.broadcast %cst_29 : f32 to vector<8x1xf32>
      %c0_30 = arith.constant 0 : index
      %c0_31 = arith.constant 0 : index
      %33 = vector.load %arg10[%c0_30, %c0_31] : memref<8x1xf32, #tpu.memory_space<vmem>>, vector<8x1xf32>
      tpu.vector_store %arg10[%c0_30, %c0_31], %32 {strides = array<i32>} : memref<8x1xf32, #tpu.memory_space<vmem>>, vector<8x1xf32>,
      %cst_32 = arith.constant 0.000000e+00 : f32
      %34 = vector.broadcast %cst_32 : f32 to vector<8x1xf32>
      %c0_33 = arith.constant 0 : index
      %c0_34 = arith.constant 0 : index
      %35 = vector.load %arg11[%c0_33, %c0_34] : memref<8x1xf32, #tpu.memory_space<vmem>>, vector<8x1xf32>
      tpu.vector_store %arg11[%c0_33, %c0_34], %34 {strides = array<i32>} : memref<8x1xf32, #tpu.memory_space<vmem>>, vector<8x1xf32>,
    } else {
    }
    %c0 = arith.constant 0 : index
    %c0_1 = arith.constant 0 : index
    %c0_2 = arith.constant 0 : index
    %3 = vector.load %arg2[%c0, %c0_1, %c0_2] : memref<1x8x256xf32, #tpu.memory_space<vmem>>, vector<1x8x256xf32>
    %4 = vector.shape_cast %3 : vector<1x8x256xf32> to vector<8x256xf32>
    %c0_3 = arith.constant 0 : index
    %c0_4 = arith.constant 0 : index
    %c0_5 = arith.constant 0 : index
    %5 = vector.load %arg4[%c0_3, %c0_4, %c0_5] : memref<1x8x256xf32, #tpu.memory_space<vmem>>, vector<1x8x256xf32>
    %6 = vector.shape_cast %5 : vector<1x8x256xf32> to vector<8x256xf32>
    %c0_6 = arith.constant 0 : index
    %c0_7 = arith.constant 0 : index
    %c0_8 = arith.constant 0 : index
    %7 = vector.load %arg3[%c0_6, %c0_7, %c0_8] : memref<1x1x256xf32, #tpu.memory_space<vmem>>, vector<1x1x256xf32>
    %8 = vector.shape_cast %7 : vector<1x1x256xf32> to vector<1x256xf32>
    %cst = arith.constant 1.000000e+00 : f32
    %9 = vector.broadcast %cst : f32 to vector<1x256xf32>
    %10 = arith.addf %9, %8 : vector<1x256xf32>
    %11 = vector.broadcast %10 : vector<1x256xf32> to vector<8x256xf32>
    %12 = arith.mulf %4, %11 : vector<8x256xf32>
    %c0_9 = arith.constant 0 : index
    %c0_10 = arith.constant 0 : index
    %13 = vector.load %arg10[%c0_9, %c0_10] : memref<8x1xf32, #tpu.memory_space<vmem>>, vector<8x1xf32>
    %cst_11 = arith.constant dense<0.000000e+00> : vector<8xf32>
    %14 = vector.multi_reduction <add>, %12, %cst_11 [1] : vector<8x256xf32> to vector<8xf32>
    %15 = vector.shape_cast %14 : vector<8xf32> to vector<8x1xf32>
    %16 = arith.addf %13, %15 : vector<8x1xf32>
    %c0_12 = arith.constant 0 : index
    %c0_13 = arith.constant 0 : index
    %17 = vector.load %arg10[%c0_12, %c0_13] : memref<8x1xf32, #tpu.memory_space<vmem>>, vector<8x1xf32>
    tpu.vector_store %arg10[%c0_12, %c0_13], %16 {strides = array<i32>} : memref<8x1xf32, #tpu.memory_space<vmem>>, vector<8x1xf32>,
    %c0_14 = arith.constant 0 : index
    %c0_15 = arith.constant 0 : index
    %18 = vector.load %arg11[%c0_14, %c0_15] : memref<8x1xf32, #tpu.memory_space<vmem>>, vector<8x1xf32>
    %cst_16 = arith.constant dense<0.000000e+00> : vector<8xf32>
    %19 = vector.multi_reduction <add>, %6, %cst_16 [1] : vector<8x256xf32> to vector<8xf32>
    %20 = vector.shape_cast %19 : vector<8xf32> to vector<8x1xf32>
    %21 = arith.addf %18, %20 : vector<8x1xf32>
    %c0_17 = arith.constant 0 : index
    %c0_18 = arith.constant 0 : index
    %22 = vector.load %arg11[%c0_17, %c0_18] : memref<8x1xf32, #tpu.memory_space<vmem>>, vector<8x1xf32>
    tpu.vector_store %arg11[%c0_17, %c0_18], %21 {strides = array<i32>} : memref<8x1xf32, #tpu.memory_space<vmem>>, vector<8x1xf32>,
    %c0_19 = arith.constant 0 : index
    %c0_20 = arith.constant 0 : index
    %c0_21 = arith.constant 0 : index
    %23 = vector.load %arg8[%c0_19, %c0_20, %c0_21] : memref<1x8x256xf32, #tpu.memory_space<vmem>>, vector<1x8x256xf32>
    %24 = vector.shape_cast %23 : vector<1x8x256xf32> to vector<8x256xf32>
    %25 = vector.shape_cast %12 : vector<8x256xf32> to vector<1x8x256xf32>
    tpu.vector_store %arg8[%c0_19, %c0_20, %c0_21], %25 {strides = array<i32>} : memref<1x8x256xf32, #tpu.memory_space<vmem>>, vector<1x8x256xf32>,
    %c0_22 = arith.constant 0 : index
    %c0_23 = arith.constant 0 : index
    %c0_24 = arith.constant 0 : index
    %26 = vector.load %arg4[%c0_22, %c0_23, %c0_24] : memref<1x8x256xf32, #tpu.memory_space<vmem>>, vector<1x8x256xf32>
    %27 = vector.shape_cast %26 : vector<1x8x256xf32> to vector<8x256xf32>
    %c0_25 = arith.constant 0 : index
    %c0_26 = arith.constant 0 : index
    %28 = vector.load %arg9[%c0_25, %c0_26] : memref<8x256xf32, #tpu.memory_space<vmem>>, vector<8x256xf32>
    tpu.vector_store %arg9[%c0_25, %c0_26], %27 {strides = array<i32>} : memref<8x256xf32, #tpu.memory_space<vmem>>, vector<8x256xf32>,
    %c0_i32_27 = arith.constant 0 : i32
    %29 = arith.cmpi eq, %arg1, %c0_i32_27 : i32
    %30 = arith.extui %29 : i1 to i32
    %c0_i32_28 = arith.constant 0 : i32
    %31 = arith.cmpi ne, %30, %c0_i32_28 : i32
    scf.if %31 {
      %c0_29 = arith.constant 0 : index
      %c0_30 = arith.constant 0 : index
      %32 = vector.load %arg10[%c0_29, %c0_30] : memref<8x1xf32, #tpu.memory_space<vmem>>, vector<8x1xf32>
      %c0_31 = arith.constant 0 : index
      %c0_32 = arith.constant 0 : index
      %33 = vector.load %arg11[%c0_31, %c0_32] : memref<8x1xf32, #tpu.memory_space<vmem>>, vector<8x1xf32>
      %c0_33 = arith.constant 0 : index
      %c0_34 = arith.constant 0 : index
      %34 = vector.load %arg5[%c0_33, %c0_34] : memref<8x2xf32, #tpu.memory_space<vmem>>, vector<8x2xf32>
      %c0_35 = arith.constant 0 : index
      %c0_36 = arith.constant 0 : index
      %35 = vector.load %arg6[%c0_35, %c0_36] : memref<8x2xf32, #tpu.memory_space<vmem>>, vector<8x2xf32>
      %c0_37 = arith.constant 0 : index
      %c0_38 = arith.constant 0 : index
      %36 = vector.load %arg7[%c0_37, %c0_38] : memref<8x2xf32, #tpu.memory_space<vmem>>, vector<8x2xf32>
      %cst_39 = arith.constant 3.906250e-03 : f32
      %37 = vector.broadcast %cst_39 : f32 to vector<8x1xf32>
      %38 = arith.mulf %32, %37 : vector<8x1xf32>
      %cst_40 = arith.constant 3.906250e-03 : f32
      %39 = vector.broadcast %cst_40 : f32 to vector<8x1xf32>
      %40 = arith.mulf %33, %39 : vector<8x1xf32>
      %41 = vector.broadcast %38 : vector<8x1xf32> to vector<8x2xf32>
      %42 = arith.mulf %34, %41 : vector<8x2xf32>
      %cst_41 = arith.constant dense<0.000000e+00> : vector<2xf32>
      %43 = vector.multi_reduction <add>, %42, %cst_41 [0] : vector<8x2xf32> to vector<2xf32>
      %44 = vector.shape_cast %43 : vector<2xf32> to vector<1x2xf32>
      %45 = vector.broadcast %40 : vector<8x1xf32> to vector<8x2xf32>
      %46 = arith.mulf %35, %45 : vector<8x2xf32>
      %cst_42 = arith.constant dense<0.000000e+00> : vector<2xf32>
      %47 = vector.multi_reduction <add>, %46, %cst_42 [0] : vector<8x2xf32> to vector<2xf32>
      %48 = vector.shape_cast %47 : vector<2xf32> to vector<1x2xf32>
      %49 = arith.addf %44, %48 : vector<1x2xf32>
      %cst_43 = arith.constant 0.000000e+00 : f32
      %50 = vector.broadcast %cst_43 : f32 to vector<1x2xf32>
      %51 = arith.maximumf %49, %50 : vector<1x2xf32>
      %52 = vector.broadcast %51 : vector<1x2xf32> to vector<8x2xf32>
      %53 = arith.mulf %36, %52 : vector<8x2xf32>
      %cst_44 = arith.constant dense<0.000000e+00> : vector<8xf32>
      %54 = vector.multi_reduction <add>, %53, %cst_44 [1] : vector<8x2xf32> to vector<8xf32>
      %55 = vector.shape_cast %54 : vector<8xf32> to vector<8x1xf32>
      %cst_45 = arith.constant 0.000000e+00 : f32
      %56 = vector.broadcast %cst_45 : f32 to vector<8x1xf32>
      %57 = arith.subf %56, %55 : vector<8x1xf32>
      %58 = math.exp %57 : vector<8x1xf32>
      %cst_46 = arith.constant 1.000000e+00 : f32
      %59 = vector.broadcast %cst_46 : f32 to vector<8x1xf32>
      %60 = arith.addf %59, %58 : vector<8x1xf32>
      %cst_47 = arith.constant 1.000000e+00 : f32
      %61 = vector.broadcast %cst_47 : f32 to vector<8x1xf32>
      %62 = arith.divf %61, %60 : vector<8x1xf32>
      %c0_48 = arith.constant 0 : index
      %c0_49 = arith.constant 0 : index
      %c0_50 = arith.constant 0 : index
      %63 = vector.load %arg8[%c0_48, %c0_49, %c0_50] : memref<1x8x256xf32, #tpu.memory_space<vmem>>, vector<1x8x256xf32>
      %64 = vector.shape_cast %63 : vector<1x8x256xf32> to vector<8x256xf32>
      %c0_51 = arith.constant 0 : index
      %c0_52 = arith.constant 0 : index
      %65 = vector.load %arg9[%c0_51, %c0_52] : memref<8x256xf32, #tpu.memory_space<vmem>>, vector<8x256xf32>
      %66 = vector.broadcast %62 : vector<8x1xf32> to vector<8x256xf32>
      %67 = arith.mulf %64, %66 : vector<8x256xf32>
      %68 = arith.addf %67, %65 : vector<8x256xf32>
      %c0_53 = arith.constant 0 : index
      %c0_54 = arith.constant 0 : index
      %c0_55 = arith.constant 0 : index
      %69 = vector.load %arg8[%c0_53, %c0_54, %c0_55] : memref<1x8x256xf32, #tpu.memory_space<vmem>>, vector<1x8x256xf32>
      %70 = vector.shape_cast %69 : vector<1x8x256xf32> to vector<8x256xf32>
      %71 = vector.shape_cast %68 : vector<8x256xf32> to vector<1x8x256xf32>
      tpu.vector_store %arg8[%c0_53, %c0_54, %c0_55], %71 {strides = array<i32>} : memref<1x8x256xf32, #tpu.memory_space<vmem>>, vector<1x8x256xf32>,
    } else {
    }
    return
  }
  func.func @transform_0(%arg0: i32, %arg1: i32) -> (i32, i32, i32) {
    %c0_i32 = arith.constant 0 : i32
    %c0_i32_0 = arith.constant 0 : i32
    return %arg0, %c0_i32, %arg1 : i32, i32, i32
  }
  func.func @transform_1(%arg0: i32, %arg1: i32) -> (i32, i32, i32) {
    %c0_i32 = arith.constant 0 : i32
    %c0_i32_0 = arith.constant 0 : i32
    return %arg0, %c0_i32, %arg1 : i32, i32, i32
  }
  func.func @transform_2(%arg0: i32, %arg1: i32) -> (i32, i32, i32) {
    %c0_i32 = arith.constant 0 : i32
    %c0_i32_0 = arith.constant 0 : i32
    return %arg0, %c0_i32, %arg1 : i32, i32, i32
  }
  func.func @transform_3(%arg0: i32, %arg1: i32) -> (i32, i32) {
    %c0_i32 = arith.constant 0 : i32
    %c0_i32_0 = arith.constant 0 : i32
    %c0_i32_1 = arith.constant 0 : i32
    return %c0_i32, %c0_i32_0 : i32, i32
  }
  func.func @transform_4(%arg0: i32, %arg1: i32) -> (i32, i32) {
    %c0_i32 = arith.constant 0 : i32
    %c0_i32_0 = arith.constant 0 : i32
    %c0_i32_1 = arith.constant 0 : i32
    return %c0_i32, %c0_i32_0 : i32, i32
  }
  func.func @transform_5(%arg0: i32, %arg1: i32) -> (i32, i32) {
    %c0_i32 = arith.constant 0 : i32
    %c0_i32_0 = arith.constant 0 : i32
    %c0_i32_1 = arith.constant 0 : i32
    return %c0_i32, %c0_i32_0 : i32, i32
  }
  func.func @transform_6(%arg0: i32, %arg1: i32) -> (i32, i32, i32) {
    %c0_i32 = arith.constant 0 : i32
    %c0_i32_0 = arith.constant 0 : i32
    %c0_i32_1 = arith.constant 0 : i32
    return %arg0, %c0_i32, %c0_i32_0 : i32, i32, i32
  }
}

</mosaic_0001>

<llo_original>
// kernel: eec_forward.1
$region0: #{eec_forward.1}
  #allocation0 [shape = 'u32[]', space=smem, size = 0x4, offset = 0x4, fixed_abs, tag = 'smem constant byte address 0x4 - core index']
  #allocation1 [shape = 'u32[144,128]{1,0:T(1,128)}', space=vmem, size = 0x12000, scoped, tag = 'internal scratch']
  #allocation2 [shape = 'f32[8,256]{1,0:T(8,128)}', space=vmem, size = 0x2000, scoped, tag = 'scratch operand']
  #allocation3 [shape = 'f32[8,1]{1,0:T(8,128)}', space=vmem, size = 0x1000, scoped, tag = 'scratch operand']
  #allocation4 [shape = 'f32[8,1]{1,0:T(8,128)}', space=vmem, size = 0x1000, scoped, tag = 'scratch operand']
  %s0 = inlined_call_operand.vmem [shape: f32[2,8,256], index: 0, kind: input, shape index: {}]
  %s1 = inlined_call_operand.vmem [shape: f32[2,1,256], index: 1, kind: input, shape index: {}]
  %s2 = inlined_call_operand.vmem [shape: f32[2,8,256], index: 2, kind: input, shape index: {}]
  %s3 = inlined_call_operand.vmem [shape: f32[8,2], index: 3, kind: input, shape index: {}]
  %s4 = inlined_call_operand.vmem [shape: f32[8,2], index: 4, kind: input, shape index: {}]
  %s5 = inlined_call_operand.vmem [shape: f32[8,2], index: 5, kind: input, shape index: {}]
  %s6 = inlined_call_operand.vmem [shape: f32[2,8,256], index: 6, kind: output, shape index: {}]
  %s7 = sld [smem:[#allocation0]]
  $region65: #{eec_forward.1} parent=0
    _
  %s9 = ssub.s32 1, %s7
  %s10 = scalar_select 0, %s9, %s7
  loop: start=0, step=1, limit=4
  $region2: #{eec_forward.1} parent=0 // loop_pre_header
    _
  $region3: #{eec_forward.1} parent=0 // loop_header
    %s12 = sphi 0, %s16
    %p13 = scmp.ge.s32.totalorder %s12, 4
    %s19 = sphi 0, %s31
    %s20 = sphi 0, %s27
    %s21 = sphi 0, %s19
    %s22 = sphi 0, %s20
    %s23 = sphi 0, %s21
    %s24 = sphi 0, %s22
    %s36 = sphi 0, %s38
    %s39 = sphi 0, %s36
    %s40 = sphi 0, %s39
    %s56 = sphi 0, %s40
    %s64 = sphi 0, %s66
    %s67 = sphi 0, %s64
    %s68 = sphi 0, %s67
    %s84 = sphi 0, %s68
    %s92 = sphi 0, %s94
    %s95 = sphi 0, %s92
    %s96 = sphi 0, %s95
    %s112 = sphi 0, %s96
    %s116 = sphi 0, %s116
    %s118 = sphi 0, %s116
    %s119 = sphi 0, %s118
    %s133 = sphi 0, %s119
    %s137 = sphi 0, %s137
    %s139 = sphi 0, %s137
    %s140 = sphi 0, %s139
    %s154 = sphi 0, %s140
    %s158 = sphi 0, %s158
    %s160 = sphi 0, %s158
    %s161 = sphi 0, %s160
    %s175 = sphi 0, %s161
    %s181 = sphi 0, %s183
    %s184 = sphi 0, %s181
    %s185 = sphi 0, %s184
    %s201 = sphi 0, %s185
  $region4: #{eec_forward.1} parent=0 // loop_header_branch
    %15 = sbr.rel (%p13) target = $region8
  $region5: #{eec_forward.1} parent=0 // loop_body
    %s17 = ssub.s32 %s12, 1
    %s18 = ssub.s32 %s12, 2
    %s25 = sadd.s32 1, %s20
    %p26 = scmp.ge.s32.totalorder %s25, 1
    %s27 = scalar_select %p26, 0, %s25
    %s28 = sadd.s32 1, %s19
    %s29 = scalar_select %p26, %s28, %s19
    %p30 = scmp.ge.s32.totalorder %s29, 2
    %s31 = scalar_select %p30, 0, %s29
    %s32 = ssub.s32 %s19, %s31
    %s33 = ssub.s32 %s20, %s27
    %s34 = sor.u32 %s32, %s33
    %p35 = scmp.eq.s32.totalorder %s34, 0
    %s37 = sadd.s32 %s36, 1
    %s38 = scalar_select %p35, %s36, %s37
    %p41 = pneg %p35
    %p42 = scmp.eq.s32.totalorder %s12, 1
    %p43 = por %p41, %p42
    %p44 = scmp.ne.s32.totalorder %s36, %s39
    %p45 = scmp.eq.s32.totalorder %s12, 0
    %p46 = por %p44, %p45
    %p47 = scmp.ne.s32.totalorder %s36, %s39
    %p48 = scmp.eq.s32.totalorder %s17, 1
    %p49 = por %p47, %p48
    %p50 = scmp.ne.s32.totalorder %s39, %s40
    %p51 = scmp.eq.s32.totalorder %s17, 0
    %p52 = por %p50, %p51
    %p53 = scmp.ne.s32.totalorder %s39, %s40
    %p54 = scmp.eq.s32.totalorder %s18, 1
    %p55 = por %p53, %p54
    %p57 = scmp.ne.s32.totalorder %s40, %s56
    %p58 = scmp.eq.s32.totalorder %s18, 0
    %p59 = por %p57, %p58
    %s60 = ssub.s32 %s19, %s31
    %s61 = ssub.s32 %s20, %s27
    %s62 = sor.u32 %s60, %s61
    %p63 = scmp.eq.s32.totalorder %s62, 0
    %s65 = sadd.s32 %s64, 1
    %s66 = scalar_select %p63, %s64, %s65
    %p69 = pneg %p63
    %p70 = scmp.eq.s32.totalorder %s12, 1
    %p71 = por %p69, %p70
    %p72 = scmp.ne.s32.totalorder %s64, %s67
    %p73 = scmp.eq.s32.totalorder %s12, 0
    %p74 = por %p72, %p73
    %p75 = scmp.ne.s32.totalorder %s64, %s67
    %p76 = scmp.eq.s32.totalorder %s17, 1
    %p77 = por %p75, %p76
    %p78 = scmp.ne.s32.totalorder %s67, %s68
    %p79 = scmp.eq.s32.totalorder %s17, 0
    %p80 = por %p78, %p79
    %p81 = scmp.ne.s32.totalorder %s67, %s68
    %p82 = scmp.eq.s32.totalorder %s18, 1
    %p83 = por %p81, %p82
    %p85 = scmp.ne.s32.totalorder %s68, %s84
    %p86 = scmp.eq.s32.totalorder %s18, 0
    %p87 = por %p85, %p86
    %s88 = ssub.s32 %s19, %s31
    %s89 = ssub.s32 %s20, %s27
    %s90 = sor.u32 %s88, %s89
    %p91 = scmp.eq.s32.totalorder %s90, 0
    %s93 = sadd.s32 %s92, 1
    %s94 = scalar_select %p91, %s92, %s93
    %p97 = pneg %p91
    %p98 = scmp.eq.s32.totalorder %s12, 1
    %p99 = por %p97, %p98
    %p100 = scmp.ne.s32.totalorder %s92, %s95
    %p101 = scmp.eq.s32.totalorder %s12, 0
    %p102 = por %p100, %p101
    %p103 = scmp.ne.s32.totalorder %s92, %s95
    %p104 = scmp.eq.s32.totalorder %s17, 1
    %p105 = por %p103, %p104
    %p106 = scmp.ne.s32.totalorder %s95, %s96
    %p107 = scmp.eq.s32.totalorder %s17, 0
    %p108 = por %p106, %p107
    %p109 = scmp.ne.s32.totalorder %s95, %s96
    %p110 = scmp.eq.s32.totalorder %s18, 1
    %p111 = por %p109, %p110
    %p113 = scmp.ne.s32.totalorder %s96, %s112
    %p114 = scmp.eq.s32.totalorder %s18, 0
    %p115 = por %p113, %p114
    %s117 = sadd.s32 %s116, 1
    %p120 = scmp.eq.s32.totalorder %s12, 1
    %p121 = scmp.ne.s32.totalorder %s116, %s118
    %p122 = scmp.eq.s32.totalorder %s12, 0
    %p123 = por %p121, %p122
    %p124 = scmp.ne.s32.totalorder %s116, %s118
    %p125 = scmp.eq.s32.totalorder %s17, 1
    %p126 = por %p124, %p125
    %p127 = scmp.ne.s32.totalorder %s118, %s119
    %p128 = scmp.eq.s32.totalorder %s17, 0
    %p129 = por %p127, %p128
    %p130 = scmp.ne.s32.totalorder %s118, %s119
    %p131 = scmp.eq.s32.totalorder %s18, 1
    %p132 = por %p130, %p131
    %p134 = scmp.ne.s32.totalorder %s119, %s133
    %p135 = scmp.eq.s32.totalorder %s18, 0
    %p136 = por %p134, %p135
    %s138 = sadd.s32 %s137, 1
    %p141 = scmp.eq.s32.totalorder %s12, 1
    %p142 = scmp.ne.s32.totalorder %s137, %s139
    %p143 = scmp.eq.s32.totalorder %s12, 0
    %p144 = por %p142, %p143
    %p145 = scmp.ne.s32.totalorder %s137, %s139
    %p146 = scmp.eq.s32.totalorder %s17, 1
    %p147 = por %p145, %p146
    %p148 = scmp.ne.s32.totalorder %s139, %s140
    %p149 = scmp.eq.s32.totalorder %s17, 0
    %p150 = por %p148, %p149
    %p151 = scmp.ne.s32.totalorder %s139, %s140
    %p152 = scmp.eq.s32.totalorder %s18, 1
    %p153 = por %p151, %p152
    %p155 = scmp.ne.s32.totalorder %s140, %s154
    %p156 = scmp.eq.s32.totalorder %s18, 0
    %p157 = por %p155, %p156
    %s159 = sadd.s32 %s158, 1
    %p162 = scmp.eq.s32.totalorder %s12, 1
    %p163 = scmp.ne.s32.totalorder %s158, %s160
    %p164 = scmp.eq.s32.totalorder %s12, 0
    %p165 = por %p163, %p164
    %p166 = scmp.ne.s32.totalorder %s158, %s160
    %p167 = scmp.eq.s32.totalorder %s17, 1
    %p168 = por %p166, %p167
    %p169 = scmp.ne.s32.totalorder %s160, %s161
    %p170 = scmp.eq.s32.totalorder %s17, 0
    %p171 = por %p169, %p170
    %p172 = scmp.ne.s32.totalorder %s160, %s161
    %p173 = scmp.eq.s32.totalorder %s18, 1
    %p174 = por %p172, %p173
    %p176 = scmp.ne.s32.totalorder %s161, %s175
    %p177 = scmp.eq.s32.totalorder %s18, 0
    %p178 = por %p176, %p177
    %s179 = ssub.s32 %s19, %s31
    %p180 = scmp.eq.s32.totalorder %s179, 0
    %s182 = sadd.s32 %s181, 1
    %s183 = scalar_select %p180, %s181, %s182
    %p186 = pneg %p180
    %p187 = scmp.eq.s32.totalorder %s12, 1
    %p188 = por %p186, %p187
    %p189 = scmp.ne.s32.totalorder %s181, %s184
    %p190 = scmp.eq.s32.totalorder %s12, 0
    %p191 = por %p189, %p190
    %p192 = scmp.ne.s32.totalorder %s181, %s184
    %p193 = scmp.eq.s32.totalorder %s17, 1
    %p194 = por %p192, %p193
    %p195 = scmp.ne.s32.totalorder %s184, %s185
    %p196 = scmp.eq.s32.totalorder %s17, 0
    %p197 = por %p195, %p196
    %p198 = scmp.ne.s32.totalorder %s184, %s185
    %p199 = scmp.eq.s32.totalorder %s18, 1
    %p200 = por %p198, %p199
    %p202 = scmp.ne.s32.totalorder %s185, %s201
    %p203 = scmp.eq.s32.totalorder %s18, 0
    %p204 = por %p202, %p203
    %p205 = scmp.le.s32.totalorder 1, %s12
    %p206 = scmp.lt.s32.totalorder %s12, 3
    %p207 = pnand %p205, %p206
    %p208 = pneg %p207
    // Predicated region
    $region9: #{eec_forward.1} parent=5 // pred_check
      _
    $region10: #{eec_forward.1} parent=5 // pred_check_branch
      %210 = sbr.rel (%p207) target = $region12
    $region11: #{eec_forward.1} parent=5 // pred_region
      %s211 = ssub.s32 %s12, 1
      // Predicated region
      $region13: #{eec_forward.1} parent=11 // pred_check
        %p212 = pneg %p129
      $region14: #{eec_forward.1} parent=11 // pred_check_branch
        %214 = sbr.rel (%p212) target = $region16
      $region15: #{eec_forward.1} parent=11 // pred_region
        _
      $region16: #{eec_forward.1} parent=11 // pred_fallthru
        _
      // Predicated region
      $region17: #{eec_forward.1} parent=11 // pred_check
        %p215 = pneg %p150
      $region18: #{eec_forward.1} parent=11 // pred_check_branch
        %217 = sbr.rel (%p215) target = $region20
      $region19: #{eec_forward.1} parent=11 // pred_region
        _
      $region20: #{eec_forward.1} parent=11 // pred_fallthru
        _
      // Predicated region
      $region21: #{eec_forward.1} parent=11 // pred_check
        %p218 = pneg %p171
      $region22: #{eec_forward.1} parent=11 // pred_check_branch
        %220 = sbr.rel (%p218) target = $region24
      $region23: #{eec_forward.1} parent=11 // pred_region
        _
      $region24: #{eec_forward.1} parent=11 // pred_fallthru
        _
    $region12: #{eec_forward.1} parent=5 // pred_fallthru
      _
    %p221 = scmp.lt.s32.totalorder %s12, 2
    // Predicated region
    $region25: #{eec_forward.1} parent=5 // pred_check
      %p222 = pneg %p221
    $region26: #{eec_forward.1} parent=5 // pred_check_branch
      %224 = sbr.rel (%p222) target = $region28
    $region27: #{eec_forward.1} parent=5 // pred_region
      // Predicated region
      $region29: #{eec_forward.1} parent=27 // pred_check
        %p225 = pneg %p46
      $region30: #{eec_forward.1} parent=27 // pred_check_branch
        %227 = sbr.rel (%p225) target = $region32
      $region31: #{eec_forward.1} parent=27 // pred_region
        %s228 = smul.u32 2, %s20
        %p229 = scmp.lt.s32.totalorder %s19, 1
        %s230 = scalar_select %p229, %s19, 1
        %p231 = scmp.lt.s32.totalorder %s228, 1
        %s232 = scalar_select %p231, %s228, 1
        %s233 = smul.addr %s230, 2
        %s234 = sadd.s32 %s232, %s233
        %s235 = smul.addr %s234, 8
        %s236 = scalar_lea.vmem %s0, %s235
        %s237 = smul.u32 2, %s20
      $region32: #{eec_forward.1} parent=27 // pred_fallthru
        _
      // Predicated region
      $region33: #{eec_forward.1} parent=27 // pred_check
        %p238 = pneg %p74
      $region34: #{eec_forward.1} parent=27 // pred_check_branch
        %240 = sbr.rel (%p238) target = $region36
      $region35: #{eec_forward.1} parent=27 // pred_region
        %s241 = smul.u32 2, %s20
        %p242 = scmp.lt.s32.totalorder %s19, 1
        %s243 = scalar_select %p242, %s19, 1
        %p244 = scmp.lt.s32.totalorder %s241, 1
        %s245 = scalar_select %p244, %s241, 1
        %s246 = smul.addr %s243, 2
        %s247 = sadd.s32 %s245, %s246
        %s248 = scalar_lea.vmem %s1, %s247
        %s249 = smul.u32 2, %s20
      $region36: #{eec_forward.1} parent=27 // pred_fallthru
        _
      // Predicated region
      $region37: #{eec_forward.1} parent=27 // pred_check
        %p250 = pneg %p102
      $region38: #{eec_forward.1} parent=27 // pred_check_branch
        %252 = sbr.rel (%p250) target = $region40
      $region39: #{eec_forward.1} parent=27 // pred_region
        %s253 = smul.u32 2, %s20
        %p254 = scmp.lt.s32.totalorder %s19, 1
        %s255 = scalar_select %p254, %s19, 1
        %p256 = scmp.lt.s32.totalorder %s253, 1
        %s257 = scalar_select %p256, %s253, 1
        %s258 = smul.addr %s255, 2
        %s259 = sadd.s32 %s257, %s258
        %s260 = smul.addr %s259, 8
        %s261 = scalar_lea.vmem %s2, %s260
        %s262 = smul.u32 2, %s20
      $region40: #{eec_forward.1} parent=27 // pred_fallthru
        _
    $region28: #{eec_forward.1} parent=5 // pred_fallthru
      _
    %p263 = scmp.le.s32.totalorder 1, %s12
    %p264 = scmp.lt.s32.totalorder %s12, 3
    %p265 = pnand %p263, %p264
    %p266 = pneg %p265
    // Predicated region
    $region41: #{eec_forward.1} parent=5 // pred_check
      _
    $region42: #{eec_forward.1} parent=5 // pred_check_branch
      %268 = sbr.rel (%p265) target = $region44
    $region43: #{eec_forward.1} parent=5 // pred_region
      %s269 = ssub.s32 %s12, 1
      %s270 = smul.u32 2, %s22
      %p271 = scmp.lt.s32.totalorder %s21, 1
      %s272 = scalar_select %p271, %s21, 1
      %p273 = scmp.lt.s32.totalorder %s270, 1
      %s274 = scalar_select %p273, %s270, 1
      %s275 = smul.addr %s272, 2
      %s276 = sadd.s32 %s274, %s275
      %s277 = smul.addr %s276, 8
      %s278 = scalar_lea.vmem %s0, %s277
      %p279 = pneg %p52
      %p280 = pneg %p49
      %s281 = smul.u32 2, %s22
      %p282 = scmp.lt.s32.totalorder %s21, 1
      %s283 = scalar_select %p282, %s21, 1
      %p284 = scmp.lt.s32.totalorder %s281, 1
      %s285 = scalar_select %p284, %s281, 1
      %s286 = smul.addr %s283, 2
      %s287 = sadd.s32 %s285, %s286
      %s288 = scalar_lea.vmem %s1, %s287
      %p289 = pneg %p80
      %p290 = pneg %p77
      %s291 = smul.u32 2, %s22
      %p292 = scmp.lt.s32.totalorder %s21, 1
      %s293 = scalar_select %p292, %s21, 1
      %p294 = scmp.lt.s32.totalorder %s291, 1
      %s295 = scalar_select %p294, %s291, 1
      %s296 = smul.addr %s293, 2
      %s297 = sadd.s32 %s295, %s296
      %s298 = smul.addr %s297, 8
      %s299 = scalar_lea.vmem %s2, %s298
      %p300 = pneg %p108
      %p301 = pneg %p105
      %p302 = pneg %p129
      %p303 = pneg %p126
      %p304 = pneg %p150
      %p305 = pneg %p147
      %p306 = pneg %p171
      %p307 = pneg %p168
      %p308 = pneg %p197
      %p309 = pneg %p194
      %p310 = scmp.lt.s32.totalorder %s21, 1
      %s311 = scalar_select %p310, %s21, 1
      %s312 = smul.addr %s311, 2
      %s313 = smul.addr %s312, 8
      %s314 = scalar_lea.vmem %s6, %s313
      %s315 = smul.u32 2, %s22
      %p316 = scmp.lt.s32.totalorder %s21, 1
      %s317 = scalar_select %p316, %s21, 1
      %p318 = scmp.lt.s32.totalorder %s315, 1
      %s319 = scalar_select %p318, %s315, 1
      %s320 = smul.addr %s317, 2
      %s321 = sadd.s32 %s319, %s320
      %s322 = smul.addr %s321, 8
      %s323 = scalar_lea.vmem %s0, %s322
      %s324 = smul.u32 2, %s22
      %s325 = smul.u32 2, %s22
      %p326 = scmp.lt.s32.totalorder %s21, 1
      %s327 = scalar_select %p326, %s21, 1
      %p328 = scmp.lt.s32.totalorder %s325, 1
      %s329 = scalar_select %p328, %s325, 1
      %s330 = smul.addr %s327, 2
      %s331 = sadd.s32 %s329, %s330
      %s332 = scalar_lea.vmem %s1, %s331
      %s333 = smul.u32 2, %s22
      %s334 = smul.u32 2, %s22
      %p335 = scmp.lt.s32.totalorder %s21, 1
      %s336 = scalar_select %p335, %s21, 1
      %p337 = scmp.lt.s32.totalorder %s334, 1
      %s338 = scalar_select %p337, %s334, 1
      %s339 = smul.addr %s336, 2
      %s340 = sadd.s32 %s338, %s339
      %s341 = smul.addr %s340, 8
      %s342 = scalar_lea.vmem %s2, %s341
      %s343 = smul.u32 2, %s22
      %p344 = scmp.lt.s32.totalorder %s21, 1
      %s345 = scalar_select %p344, %s21, 1
      %s346 = smul.addr %s345, 2
      %s347 = smul.addr %s346, 8
      %s348 = scalar_lea.vmem %s6, %s347
      %p349 = scmp.eq.s32.totalorder %s22, 0
      // Predicated region
      $region45: #{eec_forward.1} parent=43 // pred_check
        %p350 = pneg %p349
      $region46: #{eec_forward.1} parent=43 // pred_check_branch
        %352 = sbr.rel (%p350) target = $region48
      $region47: #{eec_forward.1} parent=43 // pred_region
        %vm353 = vcmask 7168
        %354 = vst.msk [vmem:[#allocation3] sm:$0xff] %vm353, 0.0
        %355 = vst.msk [vmem:[#allocation4] sm:$0xff] %vm353, 0.0
      $region48: #{eec_forward.1} parent=43 // pred_fallthru
        _
      %v356 = vld [vmem:[%s323] sm:$0xff]
      %v357 = vld [vmem:[%s323 + $0x8] sm:$0xff]
      %v358 = vld [vmem:[%s342] sm:$0xff]
      %v359 = vld [vmem:[%s342 + $0x8] sm:$0xff]
      %v360 = vld [vmem:[%s332] sm:$0x3]
      %v361 = vadd.f32 %v360, 1.0
      %v363 = vlaneseq
      %v364 = vshrl.u32 %v363, 7
      %v365 = vsub.s32 0, %v364
      %v366 = vrot.slane %v361, %v365
      %v367 = vlaneseq
      %v368 = vshrl.u32 %v367, 7
      %v369 = vsub.s32 1, %v368
      %v370 = vrot.slane %v361, %v369
      %v373 = vmul.f32 %v356, %v366
      %v374 = vmul.f32 %v357, %v370
      %v375 = vld [vmem:[#allocation3] sm:$0xff]
      %v376 = vadd.f32 %v373, %v374
      %377 = vadd.xlane.f32.xlu0 %v376
      %v378 = vpop.xlane.xlu0 %377
      %v379 = vadd.f32 %v375, %v378
      %vm380 = vcmask 7168
      %381 = vst.msk [vmem:[#allocation3] sm:$0xff] %vm380, %v379
      %v382 = vld [vmem:[#allocation4] sm:$0xff]
      %v383 = vadd.f32 %v358, %v359
      %384 = vadd.xlane.f32.xlu0 %v383
      %v385 = vpop.xlane.xlu0 %384
      %v386 = vadd.f32 %v382, %v385
      %387 = vst.msk [vmem:[#allocation4] sm:$0xff] %vm380, %v386
      %388 = vst [vmem:[%s348] sm:$0xff] %v373
      %389 = vst [vmem:[%s348 + $0x8] sm:$0xff] %v374
      %v390 = vld [vmem:[%s342] sm:$0xff]
      %v391 = vld [vmem:[%s342 + $0x8] sm:$0xff]
      %392 = vst [vmem:[#allocation2] sm:$0xff] %v390
      %393 = vst [vmem:[#allocation2 + $0x8] sm:$0xff] %v391
      // Predicated region
      $region49: #{eec_forward.1} parent=43 // pred_check
        %p394 = pneg %p349
      $region50: #{eec_forward.1} parent=43 // pred_check_branch
        %396 = sbr.rel (%p394) target = $region52
      $region51: #{eec_forward.1} parent=43 // pred_region
        %v397 = vld [vmem:[#allocation3] sm:$0xff]
        %v398 = vld [vmem:[#allocation4] sm:$0xff]
        %v399 = vld [vmem:[%s3] sm:$0xff]
        %v400 = vld [vmem:[%s4] sm:$0xff]
        %v401 = vld [vmem:[%s5] sm:$0xff]
        %v402 = vmul.f32 %v397, 0.00390625
        %v403 = vmul.f32 %v398, 0.00390625
        %405 = vset.pattern.permute.xlu0 0
        %406 = vperm.xlu0 %405, %v402
        %v407 = vpop.permute.xlu0 %406
        %v409 = vmul.f32 %v399, %v407
        %vm410 = vcmask 15360
        %v411 = vsel %vm410, %v409, 0.0
        %v412 = vrot.slane %v411, 4
        %v413 = vadd.f32 %v411, %v412
        %v414 = vrot.slane %v413, 2
        %v415 = vadd.f32 %v413, %v414
        %v416 = vrot.slane %v415, 1
        %v417 = vadd.f32 %v415, %v416
        %419 = vset.pattern.permute.xlu0 0
        %420 = vperm.xlu0 %419, %v403
        %v421 = vpop.permute.xlu0 %420
        %v423 = vmul.f32 %v400, %v421
        %v424 = vsel %vm410, %v423, 0.0
        %v425 = vrot.slane %v424, 4
        %v426 = vadd.f32 %v424, %v425
        %v427 = vrot.slane %v426, 2
        %v428 = vadd.f32 %v426, %v427
        %v429 = vrot.slane %v428, 1
        %v430 = vadd.f32 %v428, %v429
        %v431 = vadd.f32 %v417, %v430
        %v432 = vmax.f32 %v431, 0.0
        %v433 = vmul.f32 %v401, %v432
        %v434 = vsel %vm410, %v433, 0.0
        %435 = vadd.xlane.f32.xlu0 %v434
        %v436 = vpop.xlane.xlu0 %435
        %v437 = vsub.f32 0.0, %v436
        %v438 = vmul.f32 %v437, 1.442695
        %v439 = vpow.pop %v438
        %v440 = vadd.f32 %v439, 1.0
        %v441 = vrcp.pop %v440
        %v442 = vmul.f32 1.0, %v441
        %v443 = vld [vmem:[%s348] sm:$0xff]
        %v444 = vld [vmem:[%s348 + $0x8] sm:$0xff]
        %v445 = vld [vmem:[#allocation2] sm:$0xff]
        %v446 = vld [vmem:[#allocation2 + $0x8] sm:$0xff]
        %v447 = vmul.f32 %v443, %v442
        %v448 = vmul.f32 %v444, %v442
        %v449 = vadd.f32 %v447, %v445
        %v450 = vadd.f32 %v448, %v446
        %451 = vst [vmem:[%s348] sm:$0xff] %v449
        %452 = vst [vmem:[%s348 + $0x8] sm:$0xff] %v450
      $region52: #{eec_forward.1} parent=43 // pred_fallthru
        _
      %p453 = scmp.lt.s32.totalorder %s21, 1
      %s454 = scalar_select %p453, %s21, 1
      %s455 = smul.addr %s454, 2
      %s456 = smul.addr %s455, 8
      %s457 = scalar_lea.vmem %s6, %s456
      // Predicated region
      $region53: #{eec_forward.1} parent=43 // pred_check
        %p458 = pneg %p194
      $region54: #{eec_forward.1} parent=43 // pred_check_branch
        %460 = sbr.rel (%p458) target = $region56
      $region55: #{eec_forward.1} parent=43 // pred_region
        _
      $region56: #{eec_forward.1} parent=43 // pred_fallthru
        _
    $region44: #{eec_forward.1} parent=5 // pred_fallthru
      _
    %p461 = scmp.le.s32.totalorder 2, %s12
    // Predicated region
    $region57: #{eec_forward.1} parent=5 // pred_check
      %p462 = pneg %p461
    $region58: #{eec_forward.1} parent=5 // pred_check_branch
      %464 = sbr.rel (%p462) target = $region60
    $region59: #{eec_forward.1} parent=5 // pred_region
      %s465 = ssub.s32 %s12, 2
      // Predicated region
      $region61: #{eec_forward.1} parent=59 // pred_check
        %p466 = pneg %p200
      $region62: #{eec_forward.1} parent=59 // pred_check_branch
        %468 = sbr.rel (%p466) target = $region64
      $region63: #{eec_forward.1} parent=59 // pred_region
        %p469 = scmp.lt.s32.totalorder %s23, 1
        %s470 = scalar_select %p469, %s23, 1
        %s471 = smul.addr %s470, 2
        %s472 = smul.addr %s471, 8
        %s473 = scalar_lea.vmem %s6, %s472
      $region64: #{eec_forward.1} parent=59 // pred_fallthru
        _
    $region60: #{eec_forward.1} parent=5 // pred_fallthru
      _
  $region6: #{eec_forward.1} parent=0 // loop_footer
    %s16 = sadd.s32 1, %s12
  $region7: #{eec_forward.1} parent=0 // loop_footer_branch
    %11 = sbr.rel target = $region3
  $region8: #{eec_forward.1} parent=0 // loop_exit
    _

</llo_original>
